<compile_context>
chip_gen: v5e
topology: v5e:2x2
jax: 0.10.0
libtpu: 0.0.40
codegen_flags: <defaults>
</compile_context>

<pallas_src>
import jax
import jax.numpy as jnp
from jax.experimental import pallas as pl
from jax.experimental.pallas import tpu as pltpu


def _pooler_kernel(x_ref, w_ref, b_ref, o_ref):
    # x_ref: (tb, H)   w_ref: (H, P_pad)   b_ref: (1, P_pad)   o_ref: (tb, P_pad)
    # Standard contraction on H (weight pre-transposed at init); MXU
    # accumulates in f32, bias add + tanh stay in f32 before the final cast.
    y = jnp.dot(x_ref[...], w_ref[...], preferred_element_type=jnp.float32)
    y = y + b_ref[...].astype(jnp.float32)
    o_ref[...] = jnp.tanh(y).astype(o_ref.dtype)


def _round_up(x, m):
    return (x + m - 1) // m * m


def _pick_batch_tile(dim, preferred=512):
    """Largest multiple-of-8 tile <= preferred that evenly divides dim, else full dim.

    With the weight fully VMEM-resident the per-step footprint is only the
    (tb, H) x tile + (tb, P_pad) out tile (double-buffered), so a big tile is
    cheap and cuts fixed per-grid-step overhead.
    """
    if dim <= preferred:
        return dim
    t = (preferred // 8) * 8
    while t >= 8:
        if dim % t == 0:
            return t
        t -= 8
    return dim


def prepare_pooler_params(weight, bias, *, param_dtype=None):
    """One-time (model-init) layout prep for the pooler parameters.

    weight: (P, H) PyTorch nn.Linear layout; bias: (P,).
    Returns (w_t, bias2d, P) where
      w_t    : (H, P_pad) — transposed, P padded to a multiple of 128
               (lane-dense output, no per-call transpose / pad),
      bias2d : (1, P_pad),
      P      : original out_features (for the final slice if padded).
    Pass param_dtype=jnp.bfloat16 to halve the dominant weight HBM read
    (f32 accumulation is kept inside the kernel).
    """
    P, H = weight.shape
    P_pad = _round_up(P, 128)
    if P_pad != P:
        weight = jnp.pad(weight, ((0, P_pad - P), (0, 0)))
        bias = jnp.pad(bias, (0, P_pad - P))
    w_t = jnp.transpose(weight)                     # (H, P_pad), done once
    if param_dtype is not None:
        w_t = w_t.astype(param_dtype)
    return w_t, bias.reshape(1, P_pad), P


def lxrt_pooler(hidden_states, w_t, bias2d, out_features):
    """hidden_states: (B, S, H); w_t: (H, P_pad) from prepare_pooler_params;
    bias2d: (1, P_pad); out_features: original P (for un-padding)."""
    B, S, H = hidden_states.shape
    Hw, P_pad = w_t.shape
    assert Hw == H, "weight hidden dim mismatch"
    dt = hidden_states.dtype

    # Fold the seq-0 slice into the BlockSpec: view (B, S, H) as (B, S*H)
    # (free, contiguous reshape); block index 0 along the flattened axis makes
    # the Pallas DMA strided-read the first token directly from HBM.
    if H % 128 == 0:
        x2d = hidden_states.reshape(B, S * H)
    else:
        # Fallback for lane-unaligned H: explicit slice (extra HBM pass).
        x2d = hidden_states[:, 0, :]

    tb = _pick_batch_tile(B)            # batch tile (multiple of 8 or full B)
    grid = (B // tb,)                   # 1-D grid: weight/bias stay resident

    x_item = jnp.dtype(dt).itemsize
    w_item = jnp.dtype(w_t.dtype).itemsize
    weight_bytes = H * P_pad * w_item
    stream_bytes = B * (H + P_pad) * x_item
    cost = pl.CostEstimate(
        flops=2 * B * H * P_pad,
        transcendentals=B * P_pad,
        bytes_accessed=stream_bytes + weight_bytes + P_pad * 4)

    # Megacore: only shard the batch across TCs when x/out streaming clearly
    # dominates the (would-be duplicated) resident weight read.
    semantics = ("parallel",) if stream_bytes > 2 * weight_bytes else ("arbitrary",)

    out = pl.pallas_call(
        _pooler_kernel,
        out_shape=jax.ShapeDtypeStruct((B, P_pad), dt),
        grid_spec=pltpu.PrefetchScalarGridSpec(
            num_scalar_prefetch=0,
            grid=grid,
            in_specs=[
                # first-token rows: block 0 along the flattened S*H axis
                pl.BlockSpec((tb, H), lambda i: (i, 0)),
                # full weight, constant block index -> VMEM-resident
                pl.BlockSpec((H, P_pad), lambda i: (0, 0)),
                pl.BlockSpec((1, P_pad), lambda i: (0, 0)),
            ],
            out_specs=pl.BlockSpec((tb, P_pad), lambda i: (i, 0)),
        ),
        compiler_params=pltpu.CompilerParams(dimension_semantics=semantics),
        cost_estimate=cost,
    )(x2d, w_t, bias2d)

    # No-op for real LXMERT (P == 768 is already a multiple of 128).
    return out[:, :out_features] if P_pad != out_features else out


if __name__ == "__main__":
    # Small shapes consistent with the module (scaled-down stand-in for
    # LXMERT's hidden_size = 768; lane/sublane aligned so no padding path).
    B, S, H, P = 8, 8, 256, 384

    key = jax.random.PRNGKey(0)
    k_x, k_w, k_b = jax.random.split(key, 3)

    hidden_states = jax.random.normal(k_x, (B, S, H), dtype=jnp.float32)

    # Deterministic Linear init (PyTorch-style uniform(-1/sqrt(H), 1/sqrt(H))).
    bound = 1.0 / (H ** 0.5)
    weight = jax.random.uniform(k_w, (P, H), minval=-bound, maxval=bound,
                                dtype=jnp.float32)
    bias = jax.random.uniform(k_b, (P,), minval=-bound, maxval=bound,
                              dtype=jnp.float32)

    # One-time layout prep (pad / transpose / optional bf16 cast), then call.
    w_t, bias2d, out_features = prepare_pooler_params(weight, bias)
    out = lxrt_pooler(hidden_states, w_t, bias2d, out_features)
    out = jax.block_until_ready(out)

    # Reference check in plain JAX.
    ref = jnp.tanh(hidden_states[:, 0, :] @ weight.T + bias)
    assert out.shape == (B, P)
    assert jnp.allclose(out, ref, atol=1e-4, rtol=1e-4), "mismatch vs reference"

    print("KERNEL_OK")
</pallas_src>

<mosaic_0001>
module attributes {stable_mosaic.version = 11 : i64} {
  func.func @_pooler_kernel(%arg0: i32, %arg1: memref<8x256xf32, #tpu.memory_space<vmem>>, %arg2: memref<256x384xf32, #tpu.memory_space<vmem>>, %arg3: memref<1x384xf32, #tpu.memory_space<vmem>>, %arg4: memref<8x384xf32, #tpu.memory_space<vmem>>) attributes {dimension_semantics = [#tpu.dimension_semantics<arbitrary>], iteration_bounds = array<i64: 1>, scalar_prefetch = 0 : i64, scratch_operands = 0 : i64, tpu.core_type = #tpu.core_type<tc>, window_params = [{transform_indices = @transform_0, window_bounds = array<i64: 8, 256>}, {pipeline_mode = #tpu.pipeline_mode<synchronous>, transform_indices = @transform_1, window_bounds = array<i64: 256, 384>}, {pipeline_mode = #tpu.pipeline_mode<synchronous>, transform_indices = @transform_2, window_bounds = array<i64: 1, 384>}, {transform_indices = @transform_3, window_bounds = array<i64: 8, 384>}]} {
    %c0 = arith.constant 0 : index
    %c0_0 = arith.constant 0 : index
    %0 = vector.load %arg1[%c0, %c0_0] : memref<8x256xf32, #tpu.memory_space<vmem>>, vector<8x256xf32>
    %c0_1 = arith.constant 0 : index
    %c0_2 = arith.constant 0 : index
    %1 = vector.load %arg2[%c0_1, %c0_2] : memref<256x384xf32, #tpu.memory_space<vmem>>, vector<256x384xf32>
    %cst = arith.constant dense<0.000000e+00> : vector<8x384xf32>
    %2 = tpu.matmul %0, %1, %cst {dimension_numbers = #tpu.dot_dimension_numbers<[1], [0], [0], [1], [0, 0, 1, 1], [], []>} : vector<8x256xf32>, vector<256x384xf32>, vector<8x384xf32> -> vector<8x384xf32>
    %c0_3 = arith.constant 0 : index
    %c0_4 = arith.constant 0 : index
    %3 = vector.load %arg3[%c0_3, %c0_4] : memref<1x384xf32, #tpu.memory_space<vmem>>, vector<1x384xf32>
    %4 = vector.broadcast %3 : vector<1x384xf32> to vector<8x384xf32>
    %5 = arith.addf %2, %4 : vector<8x384xf32>
    %6 = math.tanh %5 : vector<8x384xf32>
    %c0_5 = arith.constant 0 : index
    %c0_6 = arith.constant 0 : index
    %7 = vector.load %arg4[%c0_5, %c0_6] : memref<8x384xf32, #tpu.memory_space<vmem>>, vector<8x384xf32>
    tpu.vector_store %arg4[%c0_5, %c0_6], %6 {strides = array<i32>} : memref<8x384xf32, #tpu.memory_space<vmem>>, vector<8x384xf32>,
    return
  }
  func.func @transform_0(%arg0: i32) -> (i32, i32) {
    %c0_i32 = arith.constant 0 : i32
    %c0_i32_0 = arith.constant 0 : i32
    return %arg0, %c0_i32 : i32, i32
  }
  func.func @transform_1(%arg0: i32) -> (i32, i32) {
    %c0_i32 = arith.constant 0 : i32
    %c0_i32_0 = arith.constant 0 : i32
    %c0_i32_1 = arith.constant 0 : i32
    return %c0_i32, %c0_i32_0 : i32, i32
  }
  func.func @transform_2(%arg0: i32) -> (i32, i32) {
    %c0_i32 = arith.constant 0 : i32
    %c0_i32_0 = arith.constant 0 : i32
    %c0_i32_1 = arith.constant 0 : i32
    return %c0_i32, %c0_i32_0 : i32, i32
  }
  func.func @transform_3(%arg0: i32) -> (i32, i32) {
    %c0_i32 = arith.constant 0 : i32
    %c0_i32_0 = arith.constant 0 : i32
    return %arg0, %c0_i32 : i32, i32
  }
}

</mosaic_0001>

<llo_original>
// kernel: tpu_custom_call.1
$region0: #{tpu_custom_call.1}
  #allocation0 [shape = 'u32[]', space=smem, size = 0x4, offset = 0x4, fixed_abs, tag = 'smem constant byte address 0x4 - core index']
  #allocation1 [shape = 'u32[72,128]{1,0:T(1,128)}', space=vmem, size = 0x9000, scoped, tag = 'internal scratch']
  %s0 = inlined_call_operand.hbm [shape: f32[8,2048], index: 0, kind: input, shape index: {}]
  %s1 = inlined_call_operand.hbm [shape: f32[256,384], index: 1, kind: input, shape index: {}]
  %s2 = inlined_call_operand.hbm [shape: f32[1,384], index: 2, kind: input, shape index: {}]
  %s3 = inlined_call_operand.hbm [shape: f32[8,384], index: 3, kind: output, shape index: {}]
  %s4 = sld [smem:[#allocation0]]
  $region34: #{tpu_custom_call.1} parent=0
    _
  %s6 = ssub.s32 1, %s4
  %s7 = scalar_select 0, %s6, %s4
  $region1: #{tpu_custom_call.1} parent=0
    #allocation2 [shape = 'u8[8192]{0}', space=vmem, size = 0x2000, scoped, tag = 'input window, operand 0, single buffered']
    #allocation3 [shape = 's32[1]{0}', space=sflag, size = 0x4, scoped, tag = 'scoped memory for tpu_custom_call.1']
    #allocation4 [shape = 's32[1]{0}', space=sflag, size = 0x4, scoped, tag = 'scoped memory for tpu_custom_call.1']
    #allocation5 [shape = 'u8[393216]{0}', space=vmem, size = 0x60000, scoped, tag = 'input window, operand 1, single buffered']
    #allocation6 [shape = 's32[1]{0}', space=sflag, size = 0x4, scoped, tag = 'scoped memory for tpu_custom_call.1']
    #allocation7 [shape = 'u8[1536]{0}', space=vmem, size = 0x800, scoped, tag = 'input window, operand 2, single buffered']
    #allocation8 [shape = 'u8[12288]{0}', space=vmem, size = 0x3000, scoped, tag = 'output window, operand 0, single buffered']
    %8 = vsyncpa [#allocation3], 0
    %9 = vsyncpa [#allocation6], 0
    %10 = vsyncpa [#allocation4], 0
    // Predicated region
    $region2: #{tpu_custom_call.1} parent=1 // pred_check
      _
    $region3: #{tpu_custom_call.1} parent=1 // pred_check_branch
      %12 = sbr.rel (0) target = $region5
    $region4: #{tpu_custom_call.1} parent=1 // pred_region
      %14 = vsyncadd [#allocation3], 0
      %s16 = sshll.u32 %s0, 4
      %s17 = int_to_ptr.hbm [resolvable:$true] %s16
      %s18 = sshll.u32 [#allocation2], 4
      %s19 = int_to_ptr.vmem [resolvable:$true] %s18
      %21 = dma.hbm_to_vmem [thread:$0]  %s17, 256, %s19, [#allocation3]
    $region5: #{tpu_custom_call.1} parent=1 // pred_fallthru
      _
    // Predicated region
    $region6: #{tpu_custom_call.1} parent=1 // pred_check
      _
    $region7: #{tpu_custom_call.1} parent=1 // pred_check_branch
      %23 = sbr.rel (0) target = $region9
    $region8: #{tpu_custom_call.1} parent=1 // pred_region
      %25 = vsyncadd [#allocation6], 0
      %s26 = sshll.u32 %s1, 4
      %s27 = int_to_ptr.hbm [resolvable:$true] %s26
      %s28 = sshll.u32 [#allocation5], 4
      %s29 = int_to_ptr.vmem [resolvable:$true] %s28
      %34 = dma.hbm_to_vmem [thread:$0]  %s27, 12288, %s29, [#allocation6], 384, 384, 24
    $region9: #{tpu_custom_call.1} parent=1 // pred_fallthru
      _
    // Predicated region
    $region10: #{tpu_custom_call.1} parent=1 // pred_check
      _
    $region11: #{tpu_custom_call.1} parent=1 // pred_check_branch
      %36 = sbr.rel (0) target = $region13
    $region12: #{tpu_custom_call.1} parent=1 // pred_region
      %38 = vsyncadd [#allocation6], 0
      %s40 = sshll.u32 %s2, 4
      %s41 = int_to_ptr.hbm [resolvable:$true] %s40
      %s42 = sshll.u32 [#allocation7], 4
      %s43 = int_to_ptr.vmem [resolvable:$true] %s42
      %45 = dma.hbm_to_vmem [thread:$0]  %s41, 48, %s43, [#allocation6]
    $region13: #{tpu_custom_call.1} parent=1 // pred_fallthru
      _
    // Predicated region
    $region14: #{tpu_custom_call.1} parent=1 // pred_check
      _
    $region15: #{tpu_custom_call.1} parent=1 // pred_check_branch
      %47 = sbr.rel (0) target = $region17
    $region16: #{tpu_custom_call.1} parent=1 // pred_region
      %49 = dma.done [#allocation3], 256
    $region17: #{tpu_custom_call.1} parent=1 // pred_fallthru
      _
    // Predicated region
    $region18: #{tpu_custom_call.1} parent=1 // pred_check
      _
    $region19: #{tpu_custom_call.1} parent=1 // pred_check_branch
      %51 = sbr.rel (0) target = $region21
    $region20: #{tpu_custom_call.1} parent=1 // pred_region
      %53 = dma.done [#allocation6], 12288
    $region21: #{tpu_custom_call.1} parent=1 // pred_fallthru
      _
    // Predicated region
    $region22: #{tpu_custom_call.1} parent=1 // pred_check
      _
    $region23: #{tpu_custom_call.1} parent=1 // pred_check_branch
      %55 = sbr.rel (0) target = $region25
    $region24: #{tpu_custom_call.1} parent=1 // pred_region
      %57 = dma.done [#allocation6], 48
    $region25: #{tpu_custom_call.1} parent=1 // pred_fallthru
      _
    %v58 = vld [vmem:[#allocation2] sm:$0xff]
    %v59 = vld [vmem:[#allocation2 + $0x8] sm:$0xff]
    %v60 = vld [vmem:[#allocation5] sm:$0xff]
    %v61 = vld [vmem:[#allocation5 + $0x8] sm:$0xff]
    %v62 = vld [vmem:[#allocation5 + $0x10] sm:$0xff]
    %v63 = vld [vmem:[#allocation5 + $0x18] sm:$0xff]
    %v64 = vld [vmem:[#allocation5 + $0x20] sm:$0xff]
    %v65 = vld [vmem:[#allocation5 + $0x28] sm:$0xff]
    %v66 = vld [vmem:[#allocation5 + $0x30] sm:$0xff]
    %v67 = vld [vmem:[#allocation5 + $0x38] sm:$0xff]
    %v68 = vld [vmem:[#allocation5 + $0x40] sm:$0xff]
    %v69 = vld [vmem:[#allocation5 + $0x48] sm:$0xff]
    %v70 = vld [vmem:[#allocation5 + $0x50] sm:$0xff]
    %v71 = vld [vmem:[#allocation5 + $0x58] sm:$0xff]
    %v72 = vld [vmem:[#allocation5 + $0x60] sm:$0xff]
    %v73 = vld [vmem:[#allocation5 + $0x68] sm:$0xff]
    %v74 = vld [vmem:[#allocation5 + $0x70] sm:$0xff]
    %v75 = vld [vmem:[#allocation5 + $0x78] sm:$0xff]
    %v76 = vld [vmem:[#allocation5 + $0x80] sm:$0xff]
    %v77 = vld [vmem:[#allocation5 + $0x88] sm:$0xff]
    %v78 = vld [vmem:[#allocation5 + $0x90] sm:$0xff]
    %v79 = vld [vmem:[#allocation5 + $0x98] sm:$0xff]
    %v80 = vld [vmem:[#allocation5 + $0xa0] sm:$0xff]
    %v81 = vld [vmem:[#allocation5 + $0xa8] sm:$0xff]
    %v82 = vld [vmem:[#allocation5 + $0xb0] sm:$0xff]
    %v83 = vld [vmem:[#allocation5 + $0xb8] sm:$0xff]
    %v84 = vld [vmem:[#allocation5 + $0xc0] sm:$0xff]
    %v85 = vld [vmem:[#allocation5 + $0xc8] sm:$0xff]
    %v86 = vld [vmem:[#allocation5 + $0xd0] sm:$0xff]
    %v87 = vld [vmem:[#allocation5 + $0xd8] sm:$0xff]
    %v88 = vld [vmem:[#allocation5 + $0xe0] sm:$0xff]
    %v89 = vld [vmem:[#allocation5 + $0xe8] sm:$0xff]
    %v90 = vld [vmem:[#allocation5 + $0xf0] sm:$0xff]
    %v91 = vld [vmem:[#allocation5 + $0xf8] sm:$0xff]
    %v92 = vld [vmem:[#allocation5 + $0x100] sm:$0xff]
    %v93 = vld [vmem:[#allocation5 + $0x108] sm:$0xff]
    %v94 = vld [vmem:[#allocation5 + $0x110] sm:$0xff]
    %v95 = vld [vmem:[#allocation5 + $0x118] sm:$0xff]
    %v96 = vld [vmem:[#allocation5 + $0x120] sm:$0xff]
    %v97 = vld [vmem:[#allocation5 + $0x128] sm:$0xff]
    %v98 = vld [vmem:[#allocation5 + $0x130] sm:$0xff]
    %v99 = vld [vmem:[#allocation5 + $0x138] sm:$0xff]
    %v100 = vld [vmem:[#allocation5 + $0x140] sm:$0xff]
    %v101 = vld [vmem:[#allocation5 + $0x148] sm:$0xff]
    %v102 = vld [vmem:[#allocation5 + $0x150] sm:$0xff]
    %v103 = vld [vmem:[#allocation5 + $0x158] sm:$0xff]
    %v104 = vld [vmem:[#allocation5 + $0x160] sm:$0xff]
    %v105 = vld [vmem:[#allocation5 + $0x168] sm:$0xff]
    %v106 = vld [vmem:[#allocation5 + $0x170] sm:$0xff]
    %v107 = vld [vmem:[#allocation5 + $0x178] sm:$0xff]
    %v108 = vld [vmem:[#allocation5 + $0x180] sm:$0xff]
    %v109 = vld [vmem:[#allocation5 + $0x188] sm:$0xff]
    %v110 = vld [vmem:[#allocation5 + $0x190] sm:$0xff]
    %v111 = vld [vmem:[#allocation5 + $0x198] sm:$0xff]
    %v112 = vld [vmem:[#allocation5 + $0x1a0] sm:$0xff]
    %v113 = vld [vmem:[#allocation5 + $0x1a8] sm:$0xff]
    %v114 = vld [vmem:[#allocation5 + $0x1b0] sm:$0xff]
    %v115 = vld [vmem:[#allocation5 + $0x1b8] sm:$0xff]
    %v116 = vld [vmem:[#allocation5 + $0x1c0] sm:$0xff]
    %v117 = vld [vmem:[#allocation5 + $0x1c8] sm:$0xff]
    %v118 = vld [vmem:[#allocation5 + $0x1d0] sm:$0xff]
    %v119 = vld [vmem:[#allocation5 + $0x1d8] sm:$0xff]
    %v120 = vld [vmem:[#allocation5 + $0x1e0] sm:$0xff]
    %v121 = vld [vmem:[#allocation5 + $0x1e8] sm:$0xff]
    %v122 = vld [vmem:[#allocation5 + $0x1f0] sm:$0xff]
    %v123 = vld [vmem:[#allocation5 + $0x1f8] sm:$0xff]
    %v124 = vld [vmem:[#allocation5 + $0x200] sm:$0xff]
    %v125 = vld [vmem:[#allocation5 + $0x208] sm:$0xff]
    %v126 = vld [vmem:[#allocation5 + $0x210] sm:$0xff]
    %v127 = vld [vmem:[#allocation5 + $0x218] sm:$0xff]
    %v128 = vld [vmem:[#allocation5 + $0x220] sm:$0xff]
    %v129 = vld [vmem:[#allocation5 + $0x228] sm:$0xff]
    %v130 = vld [vmem:[#allocation5 + $0x230] sm:$0xff]
    %v131 = vld [vmem:[#allocation5 + $0x238] sm:$0xff]
    %v132 = vld [vmem:[#allocation5 + $0x240] sm:$0xff]
    %v133 = vld [vmem:[#allocation5 + $0x248] sm:$0xff]
    %v134 = vld [vmem:[#allocation5 + $0x250] sm:$0xff]
    %v135 = vld [vmem:[#allocation5 + $0x258] sm:$0xff]
    %v136 = vld [vmem:[#allocation5 + $0x260] sm:$0xff]
    %v137 = vld [vmem:[#allocation5 + $0x268] sm:$0xff]
    %v138 = vld [vmem:[#allocation5 + $0x270] sm:$0xff]
    %v139 = vld [vmem:[#allocation5 + $0x278] sm:$0xff]
    %v140 = vld [vmem:[#allocation5 + $0x280] sm:$0xff]
    %v141 = vld [vmem:[#allocation5 + $0x288] sm:$0xff]
    %v142 = vld [vmem:[#allocation5 + $0x290] sm:$0xff]
    %v143 = vld [vmem:[#allocation5 + $0x298] sm:$0xff]
    %v144 = vld [vmem:[#allocation5 + $0x2a0] sm:$0xff]
    %v145 = vld [vmem:[#allocation5 + $0x2a8] sm:$0xff]
    %v146 = vld [vmem:[#allocation5 + $0x2b0] sm:$0xff]
    %v147 = vld [vmem:[#allocation5 + $0x2b8] sm:$0xff]
    %v148 = vld [vmem:[#allocation5 + $0x2c0] sm:$0xff]
    %v149 = vld [vmem:[#allocation5 + $0x2c8] sm:$0xff]
    %v150 = vld [vmem:[#allocation5 + $0x2d0] sm:$0xff]
    %v151 = vld [vmem:[#allocation5 + $0x2d8] sm:$0xff]
    %v152 = vld [vmem:[#allocation5 + $0x2e0] sm:$0xff]
    %v153 = vld [vmem:[#allocation5 + $0x2e8] sm:$0xff]
    %v154 = vld [vmem:[#allocation5 + $0x2f0] sm:$0xff]
    %v155 = vld [vmem:[#allocation5 + $0x2f8] sm:$0xff]
    %v156 = vld [vmem:[#allocation7] sm:$0x7]
    %v158 = vperm.slane %v156, 0
    %v159 = vperm.slane %v156, 1
    %v160 = vperm.slane %v156, 2
    %164 = vmatpush.msra.mxu0 %v105
    %165 = vmatpush.msra.mxu0 %v102
    %166 = vmatpush.msra.mxu0 %v99
    %167 = vmatpush.msra.mxu0 %v96
    %168 = vmatpush.msra.mxu0 %v93
    %169 = vmatpush.msra.mxu0 %v90
    %170 = vmatpush.msra.mxu0 %v87
    %171 = vmatpush.msra.mxu0 %v84
    %172 = vmatpush.msra.mxu0 %v81
    %173 = vmatpush.msra.mxu0 %v78
    %174 = vmatpush.msra.mxu0 %v75
    %175 = vmatpush.msra.mxu0 %v72
    %176 = vmatpush.msra.mxu0 %v69
    %177 = vmatpush.msra.mxu0 %v66
    %178 = vmatpush.msra.mxu0 %v63
    %179 = vmatpush.msra.mxu0 %v60
    %180 = vmatmul.f32.gmra.mxu0 %v58
    %v181 = vpop.f32.mrf.mxu0
    %v182 = vadd.f32 %v158, %v181
    %183 = vdwg.mxu0
    %184 = vmatpush.msra.mxu0 %v153
    %185 = vmatpush.msra.mxu0 %v150
    %186 = vmatpush.msra.mxu0 %v147
    %187 = vmatpush.msra.mxu0 %v144
    %188 = vmatpush.msra.mxu0 %v141
    %189 = vmatpush.msra.mxu0 %v138
    %190 = vmatpush.msra.mxu0 %v135
    %191 = vmatpush.msra.mxu0 %v132
    %192 = vmatpush.msra.mxu0 %v129
    %193 = vmatpush.msra.mxu0 %v126
    %194 = vmatpush.msra.mxu0 %v123
    %195 = vmatpush.msra.mxu0 %v120
    %196 = vmatpush.msra.mxu0 %v117
    %197 = vmatpush.msra.mxu0 %v114
    %198 = vmatpush.msra.mxu0 %v111
    %199 = vmatpush.msra.mxu0 %v108
    %200 = vmatmul.f32.gmra.mxu0 %v59
    %v201 = vpop.f32.mrf.mxu0
    %v202 = vadd.f32 %v182, %v201
    %203 = vdwg.mxu0
    %204 = vmatpush.msra.mxu0 %v106
    %205 = vmatpush.msra.mxu0 %v103
    %206 = vmatpush.msra.mxu0 %v100
    %207 = vmatpush.msra.mxu0 %v97
    %208 = vmatpush.msra.mxu0 %v94
    %209 = vmatpush.msra.mxu0 %v91
    %210 = vmatpush.msra.mxu0 %v88
    %211 = vmatpush.msra.mxu0 %v85
    %212 = vmatpush.msra.mxu0 %v82
    %213 = vmatpush.msra.mxu0 %v79
    %214 = vmatpush.msra.mxu0 %v76
    %215 = vmatpush.msra.mxu0 %v73
    %216 = vmatpush.msra.mxu0 %v70
    %217 = vmatpush.msra.mxu0 %v67
    %218 = vmatpush.msra.mxu0 %v64
    %219 = vmatpush.msra.mxu0 %v61
    %220 = vmatmul.f32.gmra.mxu0 %v58
    %v221 = vpop.f32.mrf.mxu0
    %v222 = vadd.f32 %v159, %v221
    %223 = vdwg.mxu0
    %224 = vmatpush.msra.mxu0 %v154
    %225 = vmatpush.msra.mxu0 %v151
    %226 = vmatpush.msra.mxu0 %v148
    %227 = vmatpush.msra.mxu0 %v145
    %228 = vmatpush.msra.mxu0 %v142
    %229 = vmatpush.msra.mxu0 %v139
    %230 = vmatpush.msra.mxu0 %v136
    %231 = vmatpush.msra.mxu0 %v133
    %232 = vmatpush.msra.mxu0 %v130
    %233 = vmatpush.msra.mxu0 %v127
    %234 = vmatpush.msra.mxu0 %v124
    %235 = vmatpush.msra.mxu0 %v121
    %236 = vmatpush.msra.mxu0 %v118
    %237 = vmatpush.msra.mxu0 %v115
    %238 = vmatpush.msra.mxu0 %v112
    %239 = vmatpush.msra.mxu0 %v109
    %240 = vmatmul.f32.gmra.mxu0 %v59
    %v241 = vpop.f32.mrf.mxu0
    %v242 = vadd.f32 %v222, %v241
    %243 = vdwg.mxu0
    %244 = vmatpush.msra.mxu0 %v107
    %245 = vmatpush.msra.mxu0 %v104
    %246 = vmatpush.msra.mxu0 %v101
    %247 = vmatpush.msra.mxu0 %v98
    %248 = vmatpush.msra.mxu0 %v95
    %249 = vmatpush.msra.mxu0 %v92
    %250 = vmatpush.msra.mxu0 %v89
    %251 = vmatpush.msra.mxu0 %v86
    %252 = vmatpush.msra.mxu0 %v83
    %253 = vmatpush.msra.mxu0 %v80
    %254 = vmatpush.msra.mxu0 %v77
    %255 = vmatpush.msra.mxu0 %v74
    %256 = vmatpush.msra.mxu0 %v71
    %257 = vmatpush.msra.mxu0 %v68
    %258 = vmatpush.msra.mxu0 %v65
    %259 = vmatpush.msra.mxu0 %v62
    %260 = vmatmul.f32.gmra.mxu0 %v58
    %v261 = vpop.f32.mrf.mxu0
    %v262 = vadd.f32 %v160, %v261
    %263 = vdwg.mxu0
    %264 = vmatpush.msra.mxu0 %v155
    %265 = vmatpush.msra.mxu0 %v152
    %266 = vmatpush.msra.mxu0 %v149
    %267 = vmatpush.msra.mxu0 %v146
    %268 = vmatpush.msra.mxu0 %v143
    %269 = vmatpush.msra.mxu0 %v140
    %270 = vmatpush.msra.mxu0 %v137
    %271 = vmatpush.msra.mxu0 %v134
    %272 = vmatpush.msra.mxu0 %v131
    %273 = vmatpush.msra.mxu0 %v128
    %274 = vmatpush.msra.mxu0 %v125
    %275 = vmatpush.msra.mxu0 %v122
    %276 = vmatpush.msra.mxu0 %v119
    %277 = vmatpush.msra.mxu0 %v116
    %278 = vmatpush.msra.mxu0 %v113
    %279 = vmatpush.msra.mxu0 %v110
    %280 = vmatmul.f32.gmra.mxu0 %v59
    %v281 = vpop.f32.mrf.mxu0
    %v282 = vadd.f32 %v262, %v281
    %283 = vdwg.mxu0
    %v284 = vtanh.pop %v202
    %v285 = vtanh.pop %v242
    %v286 = vtanh.pop %v282
    %287 = vst [vmem:[#allocation8] sm:$0xff] %v284
    %288 = vst [vmem:[#allocation8 + $0x8] sm:$0xff] %v285
    %289 = vst [vmem:[#allocation8 + $0x10] sm:$0xff] %v286
    // Predicated region
    $region26: #{tpu_custom_call.1} parent=1 // pred_check
      _
    $region27: #{tpu_custom_call.1} parent=1 // pred_check_branch
      %291 = sbr.rel (0) target = $region29
    $region28: #{tpu_custom_call.1} parent=1 // pred_region
      %293 = vsyncadd [#allocation4], 0
      %s295 = sshll.u32 [#allocation8], 4
      %s296 = int_to_ptr.vmem [resolvable:$true] %s295
      %s297 = sshll.u32 %s3, 4
      %s298 = int_to_ptr.hbm [resolvable:$true] %s297
      %300 = dma.vmem_to_hbm [thread:$0]  %s296, 384, %s298, [#allocation4]
    $region29: #{tpu_custom_call.1} parent=1 // pred_fallthru
      _
    // Predicated region
    $region30: #{tpu_custom_call.1} parent=1 // pred_check
      _
    $region31: #{tpu_custom_call.1} parent=1 // pred_check_branch
      %302 = sbr.rel (0) target = $region33
    $region32: #{tpu_custom_call.1} parent=1 // pred_region
      %304 = dma.done [#allocation4], 384
    $region33: #{tpu_custom_call.1} parent=1 // pred_fallthru
      _
    %305 = vsyncpa [#allocation3], 1
    %306 = vsyncpa [#allocation6], 1
    %307 = vsyncpa [#allocation4], 1

</llo_original>
